<compile_context>
chip_gen: v6e
topology: v6e:2x2x1
jax: 0.10.0
libtpu: 0.0.40
codegen_flags: <defaults>
</compile_context>

<pallas_src>
import jax
import jax.numpy as jnp
from jax.experimental import pallas as pl
from jax.experimental.pallas import tpu as pltpu


def _round_up(x, m):
    return ((x + m - 1) // m) * m


def _cdiv(a, b):
    return (a + b - 1) // b


def _pick_tile(dim, candidates):
    """Largest candidate that evenly divides `dim`, else the full dim."""
    for c in candidates:
        if dim >= c and dim % c == 0:
            return c
    return dim


def _sublane_multiple(dtype):
    # Packed sublane multiple: 8 for 32-bit, 16 for bf16/fp16, 32 for int8/fp8.
    return max(8, 32 // jnp.dtype(dtype).itemsize)


def _vmem_capacity_bytes():
    try:
        info = pltpu.get_tpu_info()
        cap = getattr(info, "vmem_capacity_bytes", None)
        if cap:
            return int(cap)
    except Exception:
        pass
    return 64 * 1024 * 1024  # conservative: v7x per-TensorCore VMEM


def _linear_kernel_2d(x_ref, w_ref, b_ref, o_ref):
    # Full-K contraction in one shot: no accumulator scratch, bias added in f32.
    acc = jnp.dot(x_ref[...], w_ref[...], preferred_element_type=jnp.float32)
    o_ref[...] = (acc + b_ref[...].astype(jnp.float32)).astype(o_ref.dtype)


def _linear_kernel_3d(x_ref, w_ref, b_ref, o_ref, acc_ref):
    # x_ref: (tile_m, tile_k), w_ref: (tile_k, tile_n) [already K-major],
    # b_ref: (1, tile_n), o_ref/acc_ref: (tile_m, tile_n)
    k = pl.program_id(2)

    @pl.when(k == 0)
    def _init():
        # Fold bias into the accumulator init: saves a VALU add + broadcast in the
        # finalize path that sits on the critical store edge.
        acc_ref[...] = jnp.broadcast_to(b_ref[...].astype(jnp.float32), acc_ref.shape)

    acc_ref[...] += jnp.dot(x_ref[...], w_ref[...], preferred_element_type=jnp.float32)

    @pl.when(k == pl.num_programs(2) - 1)
    def _finalize():
        o_ref[...] = acc_ref[...].astype(o_ref.dtype)


def linear_norm(x, weight, bias, *, tile_m=512, tile_n=None, tile_k=None,
                max_tile_k=2048, compute_dtype=None):
    """y = x @ weight.T + bias  (torch.nn.Linear forward semantics).

    x:      [M, K]  (K = lstm_hidden)
    weight: [E, K]  (PyTorch layout)
    bias:   [E]
    compute_dtype: optional cast for the matmul operands (e.g. jnp.bfloat16 on
                   v5e/v6e when accuracy allows); accumulation stays f32.
    """
    M, K = x.shape
    E, K2 = weight.shape
    assert K == K2 and bias.shape == (E,)
    out_dtype = x.dtype

    if compute_dtype is not None:
        x = x.astype(compute_dtype)
        weight = weight.astype(compute_dtype)

    # One-time layout change [E, K] -> [K, E] so the kernel feeds the MXU RHS
    # directly (in a real model this is a parameter-load-time transform).
    w_t = weight.T
    b2d = bias.reshape(1, E)

    sub = _sublane_multiple(x.dtype)

    # Lane-dense N tile (multiple of 128 when E allows, else the full dim).
    if tile_n is None:
        tile_n = _pick_tile(E, (512, 256, 128))
    # K tile: full K when it fits (drops reduction axis + acc scratch); otherwise
    # the largest 128-multiple tile (partial K blocks are never used: garbage in
    # the contraction would corrupt valid rows).
    if tile_k is None:
        if K <= max_tile_k or K % 128 != 0:
            tile_k = K
        else:
            tile_k = _pick_tile(K, (2048, 1024, 512, 256, 128))
    # M tile: packed-sublane multiple, capped by (rounded-up) M.
    tile_m = max(sub, min(_round_up(tile_m, sub), _round_up(M, sub)))

    # v7x has 2 TensorCores and 'parallel' axes shard across them: make sure there
    # are >= 2 parallel grid steps whenever the problem shape allows it.
    if _cdiv(M, tile_m) * (E // tile_n) < 2:
        half_m = _round_up(max(tile_m // 2, sub), sub)
        if half_m < M:
            tile_m = half_m
        elif tile_n % 256 == 0:
            tile_n //= 2

    m_steps = _cdiv(M, tile_m)      # partial last block is masked by Pallas
    n_steps = E // tile_n
    k_steps = K // tile_k

    x_item = x.dtype.itemsize
    w_item = w_t.dtype.itemsize
    b_item = bias.dtype.itemsize
    o_item = jnp.dtype(out_dtype).itemsize

    # VMEM budget from actual tile usage (double-buffered I/O + acc scratch),
    # capped against the device's physical VMEM.
    vmem_bytes = (2 * tile_m * tile_k * x_item
                  + 2 * tile_k * tile_n * w_item
                  + 2 * tile_n * b_item
                  + 2 * tile_m * tile_n * o_item)
    if k_steps > 1:
        vmem_bytes += tile_m * tile_n * 4
    vmem_cap = int(0.75 * _vmem_capacity_bytes())
    vmem_limit = int(min(max(2 * vmem_bytes, 16 * 1024 * 1024), vmem_cap))

    cost = pl.CostEstimate(
        flops=2 * M * K * E,
        transcendentals=0,
        bytes_accessed=(m_steps * E * K * w_item     # weight re-streamed per M step
                        + n_steps * M * K * x_item   # x re-streamed per N step
                        + M * E * o_item
                        + E * b_item),
    )

    if k_steps == 1:
        kernel = _linear_kernel_2d
        grid = (m_steps, n_steps)
        in_specs = [
            pl.BlockSpec((tile_m, tile_k), lambda i, j: (i, 0)),   # x
            pl.BlockSpec((tile_k, tile_n), lambda i, j: (0, j)),   # weight [K, E]
            pl.BlockSpec((1, tile_n), lambda i, j: (0, j)),        # bias
        ]
        out_spec = pl.BlockSpec((tile_m, tile_n), lambda i, j: (i, j))
        scratch = []
        dims = ("parallel", "parallel")
    else:
        kernel = _linear_kernel_3d
        grid = (m_steps, n_steps, k_steps)
        in_specs = [
            pl.BlockSpec((tile_m, tile_k), lambda i, j, k: (i, k)),   # x
            pl.BlockSpec((tile_k, tile_n), lambda i, j, k: (k, j)),   # weight [K, E]
            pl.BlockSpec((1, tile_n), lambda i, j, k: (0, j)),        # bias
        ]
        out_spec = pl.BlockSpec((tile_m, tile_n), lambda i, j, k: (i, j))
        scratch = [pltpu.VMEM((tile_m, tile_n), jnp.float32)]
        dims = ("parallel", "parallel", "arbitrary")

    return pl.pallas_call(
        kernel,
        out_shape=jax.ShapeDtypeStruct((M, E), out_dtype),
        grid_spec=pltpu.PrefetchScalarGridSpec(
            num_scalar_prefetch=0,
            grid=grid,
            in_specs=in_specs,
            out_specs=out_spec,
            scratch_shapes=scratch,
        ),
        compiler_params=pltpu.CompilerParams(
            dimension_semantics=dims,
            vmem_limit_bytes=vmem_limit,
        ),
        cost_estimate=cost,
    )(x, w_t, b2d)


if __name__ == "__main__":
    # Small shapes consistent with the module: batch=8, lstm_hidden=32, emb_dim=16.
    lstm_hidden, emb_dim, batch = 32, 16, 8

    key = jax.random.PRNGKey(0)
    kx, kw, kb, kx2, kx3, kw3, kb3 = jax.random.split(key, 7)

    x = jax.random.normal(kx, (batch, lstm_hidden), dtype=jnp.float32)
    # PyTorch-style init bounds: U(-1/sqrt(fan_in), 1/sqrt(fan_in)).
    bound = 1.0 / (lstm_hidden ** 0.5)
    weight = jax.random.uniform(kw, (emb_dim, lstm_hidden), jnp.float32, -bound, bound)
    bias = jax.random.uniform(kb, (emb_dim,), jnp.float32, -bound, bound)

    out = linear_norm(x, weight, bias)
    jax.block_until_ready(out)
    ref = x @ weight.T + bias
    assert out.shape == (batch, emb_dim)
    assert jnp.allclose(out, ref, atol=1e-5, rtol=1e-5)

    # Ragged batch (not a multiple of the tile) exercises the partial-block masking
    # path and the v7x >=2-parallel-steps adjustment.
    x2 = jax.random.normal(kx2, (batch + 3, lstm_hidden), dtype=jnp.float32)
    out2 = linear_norm(x2, weight, bias)
    jax.block_until_ready(out2)
    ref2 = x2 @ weight.T + bias
    assert out2.shape == (batch + 3, emb_dim)
    assert jnp.allclose(out2, ref2, atol=1e-5, rtol=1e-5)

    # Force the K-reduction (3-D) path with an explicit small tile_k.
    M3, K3, E3 = 16, 256, 128
    x3 = jax.random.normal(kx3, (M3, K3), dtype=jnp.float32)
    bound3 = 1.0 / (K3 ** 0.5)
    w3 = jax.random.uniform(kw3, (E3, K3), jnp.float32, -bound3, bound3)
    b3 = jax.random.uniform(kb3, (E3,), jnp.float32, -bound3, bound3)
    out3 = linear_norm(x3, w3, b3, tile_k=128)
    jax.block_until_ready(out3)
    ref3 = x3 @ w3.T + b3
    assert out3.shape == (M3, E3)
    assert jnp.allclose(out3, ref3, atol=1e-4, rtol=1e-4)

    print("KERNEL_OK")
</pallas_src>

<mosaic_0001>
module attributes {stable_mosaic.version = 11 : i64} {
  func.func @_linear_kernel_2d(%arg0: i32, %arg1: i32, %arg2: memref<8x32xf32, #tpu.memory_space<vmem>>, %arg3: memref<32x16xf32, #tpu.memory_space<vmem>>, %arg4: memref<1x16xf32, #tpu.memory_space<vmem>>, %arg5: memref<8x16xf32, #tpu.memory_space<vmem>>) attributes {dimension_semantics = [#tpu.dimension_semantics<parallel>, #tpu.dimension_semantics<parallel>], iteration_bounds = array<i64: 1, 1>, scalar_prefetch = 0 : i64, scratch_operands = 0 : i64, tpu.core_type = #tpu.core_type<tc>, window_params = [{transform_indices = @transform_0, window_bounds = array<i64: 8, 32>}, {transform_indices = @transform_1, window_bounds = array<i64: 32, 16>}, {transform_indices = @transform_2, window_bounds = array<i64: 1, 16>}, {transform_indices = @transform_3, window_bounds = array<i64: 8, 16>}]} {
    %c0 = arith.constant 0 : index
    %c0_0 = arith.constant 0 : index
    %0 = vector.load %arg2[%c0, %c0_0] : memref<8x32xf32, #tpu.memory_space<vmem>>, vector<8x32xf32>
    %c0_1 = arith.constant 0 : index
    %c0_2 = arith.constant 0 : index
    %1 = vector.load %arg3[%c0_1, %c0_2] : memref<32x16xf32, #tpu.memory_space<vmem>>, vector<32x16xf32>
    %cst = arith.constant dense<0.000000e+00> : vector<8x16xf32>
    %2 = tpu.matmul %0, %1, %cst {dimension_numbers = #tpu.dot_dimension_numbers<[1], [0], [0], [1], [0, 0, 1, 1], [], []>} : vector<8x32xf32>, vector<32x16xf32>, vector<8x16xf32> -> vector<8x16xf32>
    %c0_3 = arith.constant 0 : index
    %c0_4 = arith.constant 0 : index
    %3 = vector.load %arg4[%c0_3, %c0_4] : memref<1x16xf32, #tpu.memory_space<vmem>>, vector<1x16xf32>
    %4 = vector.broadcast %3 : vector<1x16xf32> to vector<8x16xf32>
    %5 = arith.addf %2, %4 : vector<8x16xf32>
    %c0_5 = arith.constant 0 : index
    %c0_6 = arith.constant 0 : index
    %6 = vector.load %arg5[%c0_5, %c0_6] : memref<8x16xf32, #tpu.memory_space<vmem>>, vector<8x16xf32>
    tpu.vector_store %arg5[%c0_5, %c0_6], %5 {strides = array<i32>} : memref<8x16xf32, #tpu.memory_space<vmem>>, vector<8x16xf32>,
    return
  }
  func.func @transform_0(%arg0: i32, %arg1: i32) -> (i32, i32) {
    %c0_i32 = arith.constant 0 : i32
    %c0_i32_0 = arith.constant 0 : i32
    return %arg0, %c0_i32 : i32, i32
  }
  func.func @transform_1(%arg0: i32, %arg1: i32) -> (i32, i32) {
    %c0_i32 = arith.constant 0 : i32
    %c0_i32_0 = arith.constant 0 : i32
    return %c0_i32, %arg1 : i32, i32
  }
  func.func @transform_2(%arg0: i32, %arg1: i32) -> (i32, i32) {
    %c0_i32 = arith.constant 0 : i32
    %c0_i32_0 = arith.constant 0 : i32
    return %c0_i32, %arg1 : i32, i32
  }
  func.func @transform_3(%arg0: i32, %arg1: i32) -> (i32, i32) {
    %c0_i32 = arith.constant 0 : i32
    return %arg0, %arg1 : i32, i32
  }
}

</mosaic_0001>

<llo_original>
// kernel: tpu_custom_call.1
$region0: #{tpu_custom_call.1}
  #allocation0 [shape = 'u32[]', space=smem, size = 0x4, offset = 0x4, fixed_abs, tag = 'smem constant byte address 0x4 - core index']
  #allocation1 [shape = 'u32[144,128]{1,0:T(1,128)}', space=vmem, size = 0x12000, scoped, tag = 'internal scratch']
  %s0 = inlined_call_operand.vmem [shape: f32[8,32], index: 0, kind: input, shape index: {}]
  %s1 = inlined_call_operand.vmem [shape: f32[32,16], index: 1, kind: input, shape index: {}]
  %s2 = inlined_call_operand.vmem [shape: f32[1,16], index: 2, kind: input, shape index: {}]
  %s3 = inlined_call_operand.hbm [shape: f32[8,16], index: 3, kind: output, shape index: {}]
  %s4 = sld [smem:[#allocation0]]
  $region22: #{tpu_custom_call.1} parent=0
    _
  %s6 = ssub.s32 1, %s4
  %s7 = scalar_select 0, %s6, %s4
  $region1: #{tpu_custom_call.1} parent=0
    #allocation2 [shape = 'u8[4096]{0}', space=vmem, size = 0x1000, scoped, tag = 'output window, operand 0, single buffered']
    #allocation3 [shape = 's32[1]{0}', space=sflag, size = 0x4, scoped, tag = 'scoped memory for tpu_custom_call.1']
    %8 = vsyncpa [#allocation3], 0
    // Predicated region
    $region2: #{tpu_custom_call.1} parent=1 // pred_check
      _
    $region3: #{tpu_custom_call.1} parent=1 // pred_check_branch
      %10 = sbr.rel (0) target = $region5
    $region4: #{tpu_custom_call.1} parent=1 // pred_region
      _
    $region5: #{tpu_custom_call.1} parent=1 // pred_fallthru
      _
    // Predicated region
    $region6: #{tpu_custom_call.1} parent=1 // pred_check
      _
    $region7: #{tpu_custom_call.1} parent=1 // pred_check_branch
      %12 = sbr.rel (0) target = $region9
    $region8: #{tpu_custom_call.1} parent=1 // pred_region
      _
    $region9: #{tpu_custom_call.1} parent=1 // pred_fallthru
      _
    // Predicated region
    $region10: #{tpu_custom_call.1} parent=1 // pred_check
      _
    $region11: #{tpu_custom_call.1} parent=1 // pred_check_branch
      %14 = sbr.rel (0) target = $region13
    $region12: #{tpu_custom_call.1} parent=1 // pred_region
      _
    $region13: #{tpu_custom_call.1} parent=1 // pred_fallthru
      _
    %v15 = vld [vmem:[%s0] sm:$0xff]
    %v16 = vld [vmem:[%s1] sm:$0xff]
    %v17 = vld [vmem:[%s1 + $0x8] sm:$0xff]
    %v18 = vld [vmem:[%s1 + $0x10] sm:$0xff]
    %v19 = vld [vmem:[%s1 + $0x18] sm:$0xff]
    %v20 = vld [vmem:[%s2] sm:$0x1]
    %v22 = vlaneseq
    %v23 = vshrl.u32 %v22, 7
    %v24 = vsub.s32 0, %v23
    %v25 = vrot.slane %v20, %v24
    %vm27 = vcmask 261120
    %v29 = vsel %vm27, %v15, 0
    %31 = vmatprep.subr.mxu0 0.0
    %32 = vmatpush1.msra.mxu0 0.0
    %33 = vmatprep.subr.mxu0 0.0
    %34 = vmatpush1.msra.mxu0 0.0
    %35 = vmatprep.subr.mxu0 0.0
    %36 = vmatpush1.msra.mxu0 0.0
    %37 = vmatprep.subr.mxu0 0.0
    %38 = vmatpush1.msra.mxu0 0.0
    %39 = vmatprep.subr.mxu0 0.0
    %40 = vmatpush1.msra.mxu0 0.0
    %41 = vmatprep.subr.mxu0 0.0
    %42 = vmatpush1.msra.mxu0 0.0
    %43 = vmatprep.subr.mxu0 0.0
    %44 = vmatpush1.msra.mxu0 0.0
    %45 = vmatprep.subr.mxu0 0.0
    %46 = vmatpush1.msra.mxu0 0.0
    %47 = vmatprep.subr.mxu0 0.0
    %48 = vmatpush1.msra.mxu0 0.0
    %49 = vmatprep.subr.mxu0 0.0
    %50 = vmatpush1.msra.mxu0 0.0
    %51 = vmatprep.subr.mxu0 0.0
    %52 = vmatpush1.msra.mxu0 0.0
    %53 = vmatprep.subr.mxu0 0.0
    %54 = vmatpush1.msra.mxu0 0.0
    %55 = vmatprep.subr.mxu0 0.0
    %56 = vmatpush1.msra.mxu0 %v19
    %57 = vmatprep.subr.mxu0 0.0
    %58 = vmatpush1.msra.mxu0 %v18
    %59 = vmatprep.subr.mxu0 0.0
    %60 = vmatpush1.msra.mxu0 %v17
    %61 = vmatprep.subr.mxu0 0.0
    %62 = vmatpush1.msra.mxu0 %v16
    %63 = vmatprep.subr.mxu0 0.0
    %64 = vmatpush2.msra.mxu0 0.0
    %65 = vmatprep.subr.mxu0 0.0
    %66 = vmatpush2.msra.mxu0 0.0
    %67 = vmatprep.subr.mxu0 0.0
    %68 = vmatpush2.msra.mxu0 0.0
    %69 = vmatprep.subr.mxu0 0.0
    %70 = vmatpush2.msra.mxu0 0.0
    %71 = vmatprep.subr.mxu0 0.0
    %72 = vmatpush2.msra.mxu0 0.0
    %73 = vmatprep.subr.mxu0 0.0
    %74 = vmatpush2.msra.mxu0 0.0
    %75 = vmatprep.subr.mxu0 0.0
    %76 = vmatpush2.msra.mxu0 0.0
    %77 = vmatprep.subr.mxu0 0.0
    %78 = vmatpush2.msra.mxu0 0.0
    %79 = vmatprep.subr.mxu0 0.0
    %80 = vmatpush2.msra.mxu0 0.0
    %81 = vmatprep.subr.mxu0 0.0
    %82 = vmatpush2.msra.mxu0 0.0
    %83 = vmatprep.subr.mxu0 0.0
    %84 = vmatpush2.msra.mxu0 0.0
    %85 = vmatprep.subr.mxu0 0.0
    %86 = vmatpush2.msra.mxu0 0.0
    %87 = vmatprep.subr.mxu0 0.0
    %88 = vmatpush2.msra.mxu0 0.0
    %89 = vmatprep.subr.mxu0 0.0
    %90 = vmatpush2.msra.mxu0 0.0
    %91 = vmatprep.subr.mxu0 0.0
    %92 = vmatpush2.msra.mxu0 0.0
    %93 = vmatprep.subr.mxu0 0.0
    %94 = vmatpush2.msra.mxu0 0.0
    %95 = vmatprep.mubr.f32.mxu0 0.0
    %96 = vmatmul.mubr.f32.gmra.mxu0 %v29
    %v97 = vpop.f32.mrf.mxu0
    %v98 = vadd.f32 %v25, %v97
    %v99 = vpop.f32.mrf.mxu0
    %100 = vdwg.mxu0
    %vm101 = vcmask 130048
    %102 = vst.msk [vmem:[#allocation2] sm:$0xff] %vm101, %v98
    // Predicated region
    $region14: #{tpu_custom_call.1} parent=1 // pred_check
      _
    $region15: #{tpu_custom_call.1} parent=1 // pred_check_branch
      %104 = sbr.rel (0) target = $region17
    $region16: #{tpu_custom_call.1} parent=1 // pred_region
      %s106 = ssub.s32 128, 128
      %107 = vsyncadd [#allocation3], %s106
      %s109 = sshll.u32 [#allocation2], 4
      %s110 = int_to_ptr.vmem [resolvable:$true] %s109
      %112 = dma.vmem_to_hbm [thread:$0]  %s110, 128, %s3, [#allocation3]
    $region17: #{tpu_custom_call.1} parent=1 // pred_fallthru
      _
    // Predicated region
    $region18: #{tpu_custom_call.1} parent=1 // pred_check
      _
    $region19: #{tpu_custom_call.1} parent=1 // pred_check_branch
      %114 = sbr.rel (0) target = $region21
    $region20: #{tpu_custom_call.1} parent=1 // pred_region
      %115 = dma.done [#allocation3], 128
    $region21: #{tpu_custom_call.1} parent=1 // pred_fallthru
      _
    %116 = vsyncpa [#allocation3], 1

</llo_original>
